<compile_context>
chip_gen: v5e
topology: v5e:2x2
jax: 0.10.0
libtpu: 0.0.40
codegen_flags: <defaults>
</compile_context>

<pallas_src>
import functools

import jax
import jax.numpy as jnp
from jax.experimental import pallas as pl
from jax.experimental.pallas import tpu as pltpu


def _critic_mlp_kernel(st_ref, at_ref, w1st_ref, w1at_ref, b1_ref,
                       w2t_ref, b2_ref, w3t_ref, b3_ref, o_ref):
    """Fused (linear -> relu) x2 -> linear on one batch tile.

    All activations are (features, tb): the batch sits on the lane axis.
    """
    n_state = st_ref.shape[0]
    n_action = at_ref.shape[0]
    n_in = n_state + n_action

    st = st_ref[...]                    # (n_state, tb)  f32
    at = at_ref[...]                    # (n_action, tb) f32
    w1st = w1st_ref[...]                # (h1, n_state)
    w1at = w1at_ref[...]                # (h1, n_action)

    # ---- Layer 1: x @ W1.T with the concat folded in --------------------
    if n_in <= 16:
        # K is tiny: a few VPU broadcast MACs beat a K=4 MXU matmul.
        # w1[:, i:i+1] is a per-sublane scalar column, x[i:i+1, :] a lane row.
        h1 = b1_ref[...] + w1st[:, 0:1] * st[0:1, :]
        for i in range(1, n_state):
            h1 = h1 + w1st[:, i:i + 1] * st[i:i + 1, :]
        for j in range(n_action):
            h1 = h1 + w1at[:, j:j + 1] * at[j:j + 1, :]
    else:
        h1 = jax.lax.dot_general(w1st, st, (((1,), (0,)), ((), ())),
                                 preferred_element_type=jnp.float32)
        h1 = h1 + jax.lax.dot_general(w1at, at, (((1,), (0,)), ((), ())),
                                      preferred_element_type=jnp.float32)
        h1 = h1 + b1_ref[...]
    h1 = jnp.maximum(h1, 0.0)           # (h1, tb)

    # ---- Layer 2 (MXU): (h2, h1) @ (h1, tb) -> (h2, tb) ------------------
    h2 = jax.lax.dot_general(w2t_ref[...], h1, (((1,), (0,)), ((), ())),
                             preferred_element_type=jnp.float32)
    h2 = jnp.maximum(h2 + b2_ref[...], 0.0)

    # ---- Layer 3: (n_out, h2) @ (h2, tb) -> (n_out, tb); lane-dense store.
    q = jax.lax.dot_general(w3t_ref[...], h2, (((1,), (0,)), ((), ())),
                            preferred_element_type=jnp.float32)
    o_ref[...] = (q + b3_ref[...]).astype(o_ref.dtype)


def _round_up(x, m):
    return ((x + m - 1) // m) * m


def _choose_tile(batch, block_b):
    """Pick the batch (lane) tile size and grid length.

    - B < 256: one exact tile (no padding, single step).
    - B >= 256: >=2 tiles (so v7x megacore has work for both TensorCores),
      tb a multiple of 128 minimising tail padding, tie-broken by the
      largest tile (fewest ~0.35us grid steps).
    """
    if batch < 256:
        return batch, 1
    max_tb = min(block_b, _round_up(-(-batch // 2), 128))
    max_tb = max(max_tb, 128)
    best_tb, best_grid, best_key = None, None, None
    for tb in range(128, max_tb + 1, 128):
        grid_n = -(-batch // tb)
        pad = grid_n * tb - batch
        key = (pad, -tb)
        if best_key is None or key < best_key:
            best_tb, best_grid, best_key = tb, grid_n, key
    return best_tb, best_grid


@functools.partial(jax.jit, static_argnames=("block_b",))
def critic_forward(state, action, params, block_b=512):
    """Pallas-backed CriticNetwork.forward."""
    w1, b1, w2, b2, w3, b3 = params     # w*: (in, out), b*: (1, out)
    B, n_state = state.shape
    n_action = action.shape[1]
    n_in = n_state + n_action
    h1_dim = w1.shape[1]
    h2_dim = w2.shape[1]
    n_out = w3.shape[1]

    # Batch-on-lanes: everything the kernel sees is (features, batch).
    st = state.astype(jnp.float32).T    # (n_state, B)   (matches .float())
    at = action.astype(jnp.float32).T   # (n_action, B)

    # Weight plumbing (tiny, weights only): pre-transposed so the kernel
    # never needs an in-kernel transpose (XLU).
    w1st = w1[:n_state].T               # (h1, n_state)
    w1at = w1[n_state:].T               # (h1, n_action)
    b1t = b1.T                          # (h1, 1)
    w2t = w2.T                          # (h2, h1)
    b2t = b2.T                          # (h2, 1)
    w3t = w3.T                          # (n_out, h2)
    b3t = b3.T                          # (n_out, 1)

    tb, grid_n = _choose_tile(B, block_b)
    b_pad = grid_n * tb
    if b_pad != B:
        # Zero-pad the batch so the last tile never reads OOB garbage.
        st = jnp.pad(st, ((0, 0), (0, b_pad - B)))
        at = jnp.pad(at, ((0, 0), (0, b_pad - B)))

    full = lambda i: (0, 0)             # weights/biases: resident every step

    flops = 2 * B * (n_in * h1_dim + h1_dim * h2_dim + h2_dim * n_out)
    bytes_accessed = 4 * (B * (n_in + n_out)
                          + n_in * h1_dim + h1_dim
                          + h1_dim * h2_dim + h2_dim
                          + h2_dim * n_out + n_out)

    out = pl.pallas_call(
        _critic_mlp_kernel,
        out_shape=jax.ShapeDtypeStruct((n_out, b_pad), jnp.float32),
        grid_spec=pl.GridSpec(
            grid=(grid_n,),
            in_specs=[
                pl.BlockSpec((n_state, tb), lambda i: (0, i)),    # state^T
                pl.BlockSpec((n_action, tb), lambda i: (0, i)),   # action^T
                pl.BlockSpec((h1_dim, n_state), full),            # W1s^T
                pl.BlockSpec((h1_dim, n_action), full),           # W1a^T
                pl.BlockSpec((h1_dim, 1), full),                  # b1^T
                pl.BlockSpec((h2_dim, h1_dim), full),             # W2^T
                pl.BlockSpec((h2_dim, 1), full),                  # b2^T
                pl.BlockSpec((n_out, h2_dim), full),              # W3^T
                pl.BlockSpec((n_out, 1), full),                   # b3^T
            ],
            out_specs=pl.BlockSpec((n_out, tb), lambda i: (0, i)),
        ),
        compiler_params=pltpu.CompilerParams(
            dimension_semantics=("parallel",)),
        cost_estimate=pl.CostEstimate(
            flops=int(flops), transcendentals=0,
            bytes_accessed=int(bytes_accessed)),
    )(st, at, w1st, w1at, b1t, w2t, b2t, w3t, b3t)

    # (n_out, b_pad) -> drop padding -> (B, n_out) -> torch.squeeze.
    # Note: like torch.squeeze, B == 1 collapses to a scalar.
    q = out[:, :B].T
    return jnp.squeeze(q)


def init_params(key, n_input, n_features, n_output):
    """Matches nn.Linear + xavier_uniform_ init from the PyTorch __init__.

    Weights returned pre-transposed to (in, out); biases as (1, out).
    PyTorch bias init: U(-1/sqrt(fan_in), 1/sqrt(fan_in)).
    Gains: 'relu' -> sqrt(2) for h1/h2, 'linear' -> 1 for h3.
    """
    def xavier(key, fan_in, fan_out, gain):
        bound = gain * jnp.sqrt(6.0 / (fan_in + fan_out))
        return jax.random.uniform(key, (fan_in, fan_out), jnp.float32,
                                  -bound, bound)

    def bias(key, fan_in, fan_out):
        bound = 1.0 / jnp.sqrt(fan_in)
        return jax.random.uniform(key, (1, fan_out), jnp.float32,
                                  -bound, bound)

    gain_relu = jnp.sqrt(2.0)
    gain_linear = 1.0
    k1, k2, k3, k4, k5, k6 = jax.random.split(key, 6)
    w1 = xavier(k1, n_input, n_features[0], gain_relu)
    b1 = bias(k2, n_input, n_features[0])
    w2 = xavier(k3, n_features[0], n_features[1], gain_relu)
    b2 = bias(k4, n_features[0], n_features[1])
    w3 = xavier(k5, n_features[1], n_output, gain_linear)
    b3 = bias(k6, n_features[1], n_output)
    return (w1, b1, w2, b2, w3, b3)


def _reference_forward(state, action, params):
    """Pure-JAX reference for correctness check."""
    w1, b1, w2, b2, w3, b3 = params
    x = jnp.concatenate(
        [state.astype(jnp.float32), action.astype(jnp.float32)], axis=1)
    h1 = jax.nn.relu(x @ w1 + b1)
    h2 = jax.nn.relu(h1 @ w2 + b2)
    return jnp.squeeze(h2 @ w3 + b3)


if __name__ == "__main__":
    # Pendulum-like shapes: state dim 3, action dim 1 -> n_input = 4.
    n_state, n_action = 3, 1
    n_input = n_state + n_action
    n_features = (32, 32)
    n_output = 1

    key = jax.random.PRNGKey(0)
    k_params, k_s1, k_a1, k_s2, k_a2 = jax.random.split(key, 5)
    params = init_params(k_params, n_input, n_features, n_output)

    # Small case (single exact tile, no padding).
    batch = 8
    state = jax.random.normal(k_s1, (batch, n_state), jnp.float32)
    action = jax.random.normal(k_a1, (batch, n_action), jnp.float32)
    q = jax.block_until_ready(critic_forward(state, action, params))
    q_ref = _reference_forward(state, action, params)
    assert q.shape == (batch,), q.shape
    assert jnp.allclose(q, q_ref, atol=1e-5, rtol=1e-5), (q, q_ref)

    # Larger case exercising the multi-tile, lane-dense, padded-edge path.
    batch2 = 800
    state2 = jax.random.normal(k_s2, (batch2, n_state), jnp.float32)
    action2 = jax.random.normal(k_a2, (batch2, n_action), jnp.float32)
    q2 = jax.block_until_ready(critic_forward(state2, action2, params))
    q2_ref = _reference_forward(state2, action2, params)
    assert q2.shape == (batch2,), q2.shape
    assert jnp.allclose(q2, q2_ref, atol=1e-4, rtol=1e-4)

    print("KERNEL_OK")
</pallas_src>

<mosaic_0001>
module attributes {stable_mosaic.version = 11 : i64} {
  func.func @_critic_mlp_kernel(%arg0: i32, %arg1: memref<3x8xf32, #tpu.memory_space<vmem>>, %arg2: memref<1x8xf32, #tpu.memory_space<vmem>>, %arg3: memref<32x3xf32, #tpu.memory_space<vmem>>, %arg4: memref<32x1xf32, #tpu.memory_space<vmem>>, %arg5: memref<32x1xf32, #tpu.memory_space<vmem>>, %arg6: memref<32x32xf32, #tpu.memory_space<vmem>>, %arg7: memref<32x1xf32, #tpu.memory_space<vmem>>, %arg8: memref<1x32xf32, #tpu.memory_space<vmem>>, %arg9: memref<1x1xf32, #tpu.memory_space<vmem>>, %arg10: memref<1x8xf32, #tpu.memory_space<vmem>>) attributes {dimension_semantics = [#tpu.dimension_semantics<parallel>], iteration_bounds = array<i64: 1>, scalar_prefetch = 0 : i64, scratch_operands = 0 : i64, tpu.core_type = #tpu.core_type<tc>, window_params = [{transform_indices = @transform_0, window_bounds = array<i64: 3, 8>}, {transform_indices = @transform_1, window_bounds = array<i64: 1, 8>}, {pipeline_mode = #tpu.pipeline_mode<synchronous>, transform_indices = @transform_2, window_bounds = array<i64: 32, 3>}, {pipeline_mode = #tpu.pipeline_mode<synchronous>, transform_indices = @transform_3, window_bounds = array<i64: 32, 1>}, {pipeline_mode = #tpu.pipeline_mode<synchronous>, transform_indices = @transform_4, window_bounds = array<i64: 32, 1>}, {pipeline_mode = #tpu.pipeline_mode<synchronous>, transform_indices = @transform_5, window_bounds = array<i64: 32, 32>}, {pipeline_mode = #tpu.pipeline_mode<synchronous>, transform_indices = @transform_6, window_bounds = array<i64: 32, 1>}, {pipeline_mode = #tpu.pipeline_mode<synchronous>, transform_indices = @transform_7, window_bounds = array<i64: 1, 32>}, {pipeline_mode = #tpu.pipeline_mode<synchronous>, transform_indices = @transform_8, window_bounds = array<i64: 1, 1>}, {transform_indices = @transform_9, window_bounds = array<i64: 1, 8>}]} {
    %c0 = arith.constant 0 : index
    %c0_0 = arith.constant 0 : index
    %0 = vector.load %arg1[%c0, %c0_0] : memref<3x8xf32, #tpu.memory_space<vmem>>, vector<3x8xf32>
    %c0_1 = arith.constant 0 : index
    %c0_2 = arith.constant 0 : index
    %1 = vector.load %arg2[%c0_1, %c0_2] : memref<1x8xf32, #tpu.memory_space<vmem>>, vector<1x8xf32>
    %c0_3 = arith.constant 0 : index
    %c0_4 = arith.constant 0 : index
    %2 = vector.load %arg3[%c0_3, %c0_4] : memref<32x3xf32, #tpu.memory_space<vmem>>, vector<32x3xf32>
    %c0_5 = arith.constant 0 : index
    %c0_6 = arith.constant 0 : index
    %3 = vector.load %arg4[%c0_5, %c0_6] : memref<32x1xf32, #tpu.memory_space<vmem>>, vector<32x1xf32>
    %c0_7 = arith.constant 0 : index
    %c0_8 = arith.constant 0 : index
    %4 = vector.load %arg5[%c0_7, %c0_8] : memref<32x1xf32, #tpu.memory_space<vmem>>, vector<32x1xf32>
    %5 = vector.extract_strided_slice %2 {offsets = [0, 0], sizes = [32, 1], strides = [1, 1]} : vector<32x3xf32> to vector<32x1xf32>
    %6 = vector.extract_strided_slice %0 {offsets = [0, 0], sizes = [1, 8], strides = [1, 1]} : vector<3x8xf32> to vector<1x8xf32>
    %7 = vector.broadcast %5 : vector<32x1xf32> to vector<32x8xf32>
    %8 = vector.broadcast %6 : vector<1x8xf32> to vector<32x8xf32>
    %9 = arith.mulf %7, %8 : vector<32x8xf32>
    %10 = vector.broadcast %4 : vector<32x1xf32> to vector<32x8xf32>
    %11 = arith.addf %10, %9 : vector<32x8xf32>
    %12 = vector.extract_strided_slice %2 {offsets = [0, 1], sizes = [32, 1], strides = [1, 1]} : vector<32x3xf32> to vector<32x1xf32>
    %13 = vector.extract_strided_slice %0 {offsets = [1, 0], sizes = [1, 8], strides = [1, 1]} : vector<3x8xf32> to vector<1x8xf32>
    %14 = vector.broadcast %12 : vector<32x1xf32> to vector<32x8xf32>
    %15 = vector.broadcast %13 : vector<1x8xf32> to vector<32x8xf32>
    %16 = arith.mulf %14, %15 : vector<32x8xf32>
    %17 = arith.addf %11, %16 : vector<32x8xf32>
    %18 = vector.extract_strided_slice %2 {offsets = [0, 2], sizes = [32, 1], strides = [1, 1]} : vector<32x3xf32> to vector<32x1xf32>
    %19 = vector.extract_strided_slice %0 {offsets = [2, 0], sizes = [1, 8], strides = [1, 1]} : vector<3x8xf32> to vector<1x8xf32>
    %20 = vector.broadcast %18 : vector<32x1xf32> to vector<32x8xf32>
    %21 = vector.broadcast %19 : vector<1x8xf32> to vector<32x8xf32>
    %22 = arith.mulf %20, %21 : vector<32x8xf32>
    %23 = arith.addf %17, %22 : vector<32x8xf32>
    %24 = vector.broadcast %3 : vector<32x1xf32> to vector<32x8xf32>
    %25 = vector.broadcast %1 : vector<1x8xf32> to vector<32x8xf32>
    %26 = arith.mulf %24, %25 : vector<32x8xf32>
    %27 = arith.addf %23, %26 : vector<32x8xf32>
    %cst = arith.constant 0.000000e+00 : f32
    %28 = vector.broadcast %cst : f32 to vector<32x8xf32>
    %29 = arith.maximumf %27, %28 : vector<32x8xf32>
    %c0_9 = arith.constant 0 : index
    %c0_10 = arith.constant 0 : index
    %30 = vector.load %arg6[%c0_9, %c0_10] : memref<32x32xf32, #tpu.memory_space<vmem>>, vector<32x32xf32>
    %cst_11 = arith.constant dense<0.000000e+00> : vector<32x8xf32>
    %31 = tpu.matmul %30, %29, %cst_11 {dimension_numbers = #tpu.dot_dimension_numbers<[1], [0], [0], [1], [0, 0, 1, 1], [], []>} : vector<32x32xf32>, vector<32x8xf32>, vector<32x8xf32> -> vector<32x8xf32>
    %c0_12 = arith.constant 0 : index
    %c0_13 = arith.constant 0 : index
    %32 = vector.load %arg7[%c0_12, %c0_13] : memref<32x1xf32, #tpu.memory_space<vmem>>, vector<32x1xf32>
    %33 = vector.broadcast %32 : vector<32x1xf32> to vector<32x8xf32>
    %34 = arith.addf %31, %33 : vector<32x8xf32>
    %cst_14 = arith.constant 0.000000e+00 : f32
    %35 = vector.broadcast %cst_14 : f32 to vector<32x8xf32>
    %36 = arith.maximumf %34, %35 : vector<32x8xf32>
    %c0_15 = arith.constant 0 : index
    %c0_16 = arith.constant 0 : index
    %37 = vector.load %arg8[%c0_15, %c0_16] : memref<1x32xf32, #tpu.memory_space<vmem>>, vector<1x32xf32>
    %cst_17 = arith.constant dense<0.000000e+00> : vector<1x8xf32>
    %38 = tpu.matmul %37, %36, %cst_17 {dimension_numbers = #tpu.dot_dimension_numbers<[1], [0], [0], [1], [0, 0, 1, 1], [], []>} : vector<1x32xf32>, vector<32x8xf32>, vector<1x8xf32> -> vector<1x8xf32>
    %c0_18 = arith.constant 0 : index
    %c0_19 = arith.constant 0 : index
    %39 = vector.load %arg9[%c0_18, %c0_19] : memref<1x1xf32, #tpu.memory_space<vmem>>, vector<1x1xf32>
    %40 = vector.broadcast %39 : vector<1x1xf32> to vector<1x8xf32>
    %41 = arith.addf %38, %40 : vector<1x8xf32>
    %c0_20 = arith.constant 0 : index
    %c0_21 = arith.constant 0 : index
    %42 = vector.load %arg10[%c0_20, %c0_21] : memref<1x8xf32, #tpu.memory_space<vmem>>, vector<1x8xf32>
    tpu.vector_store %arg10[%c0_20, %c0_21], %41 {strides = array<i32>} : memref<1x8xf32, #tpu.memory_space<vmem>>, vector<1x8xf32>,
    return
  }
  func.func @transform_0(%arg0: i32) -> (i32, i32) {
    %c0_i32 = arith.constant 0 : i32
    %c0_i32_0 = arith.constant 0 : i32
    return %c0_i32, %arg0 : i32, i32
  }
  func.func @transform_1(%arg0: i32) -> (i32, i32) {
    %c0_i32 = arith.constant 0 : i32
    %c0_i32_0 = arith.constant 0 : i32
    return %c0_i32, %arg0 : i32, i32
  }
  func.func @transform_2(%arg0: i32) -> (i32, i32) {
    %c0_i32 = arith.constant 0 : i32
    %c0_i32_0 = arith.constant 0 : i32
    %c0_i32_1 = arith.constant 0 : i32
    return %c0_i32, %c0_i32_0 : i32, i32
  }
  func.func @transform_3(%arg0: i32) -> (i32, i32) {
    %c0_i32 = arith.constant 0 : i32
    %c0_i32_0 = arith.constant 0 : i32
    %c0_i32_1 = arith.constant 0 : i32
    return %c0_i32, %c0_i32_0 : i32, i32
  }
  func.func @transform_4(%arg0: i32) -> (i32, i32) {
    %c0_i32 = arith.constant 0 : i32
    %c0_i32_0 = arith.constant 0 : i32
    %c0_i32_1 = arith.constant 0 : i32
    return %c0_i32, %c0_i32_0 : i32, i32
  }
  func.func @transform_5(%arg0: i32) -> (i32, i32) {
    %c0_i32 = arith.constant 0 : i32
    %c0_i32_0 = arith.constant 0 : i32
    %c0_i32_1 = arith.constant 0 : i32
    return %c0_i32, %c0_i32_0 : i32, i32
  }
  func.func @transform_6(%arg0: i32) -> (i32, i32) {
    %c0_i32 = arith.constant 0 : i32
    %c0_i32_0 = arith.constant 0 : i32
    %c0_i32_1 = arith.constant 0 : i32
    return %c0_i32, %c0_i32_0 : i32, i32
  }
  func.func @transform_7(%arg0: i32) -> (i32, i32) {
    %c0_i32 = arith.constant 0 : i32
    %c0_i32_0 = arith.constant 0 : i32
    %c0_i32_1 = arith.constant 0 : i32
    return %c0_i32, %c0_i32_0 : i32, i32
  }
  func.func @transform_8(%arg0: i32) -> (i32, i32) {
    %c0_i32 = arith.constant 0 : i32
    %c0_i32_0 = arith.constant 0 : i32
    %c0_i32_1 = arith.constant 0 : i32
    return %c0_i32, %c0_i32_0 : i32, i32
  }
  func.func @transform_9(%arg0: i32) -> (i32, i32) {
    %c0_i32 = arith.constant 0 : i32
    %c0_i32_0 = arith.constant 0 : i32
    return %c0_i32, %arg0 : i32, i32
  }
}

</mosaic_0001>

<llo_original>
// kernel: critic_forward.1
$region0: #{critic_forward.1}
  #allocation0 [shape = 'u32[]', space=smem, size = 0x4, offset = 0x4, fixed_abs, tag = 'smem constant byte address 0x4 - core index']
  #allocation1 [shape = 'u32[72,128]{1,0:T(1,128)}', space=vmem, size = 0x9000, scoped, tag = 'internal scratch']
  #allocation2 [shape = 'f32[1,1]{1,0:T(1,128)S(1)}', space=vmem, size = 0x200, scoped, tag = 'scoped memory for critic_forward.1']
  %s0 = inlined_call_operand.vmem [shape: f32[3,8], index: 0, kind: input, shape index: {}]
  %s1 = inlined_call_operand.vmem [shape: f32[1,8], index: 1, kind: input, shape index: {}]
  %s2 = inlined_call_operand.vmem [shape: f32[32,3], index: 2, kind: input, shape index: {}]
  %s3 = inlined_call_operand.vmem [shape: f32[32,1], index: 3, kind: input, shape index: {}]
  %s4 = inlined_call_operand.vmem [shape: f32[32,1], index: 4, kind: input, shape index: {}]
  %s5 = inlined_call_operand.vmem [shape: f32[32,32], index: 5, kind: input, shape index: {}]
  %s6 = inlined_call_operand.vmem [shape: f32[32,1], index: 6, kind: input, shape index: {}]
  %s7 = inlined_call_operand.vmem [shape: f32[1,32], index: 7, kind: input, shape index: {}]
  %s8 = inlined_call_operand.<no memory space> [shape: f32[1,1], index: 8, kind: input, shape index: {}]
  %s9 = inlined_call_operand.hbm [shape: f32[1,8], index: 9, kind: output, shape index: {}]
  %s10 = sld [smem:[#allocation0]]
  $region46: #{critic_forward.1} parent=0
    _
  %s12 = ssub.s32 1, %s10
  %s13 = scalar_select 0, %s12, %s10
  %v14 = vstv %s8
  %15 = vst [vmem:[#allocation2] sm:$0x1] %v14
  $region1: #{critic_forward.1} parent=0
    #allocation3 [shape = 'u8[512]{0}', space=vmem, size = 0x400, scoped, tag = 'output window, operand 0, single buffered']
    #allocation4 [shape = 's32[1]{0}', space=sflag, size = 0x4, scoped, tag = 'scoped memory for critic_forward.1']
    %16 = vsyncpa [#allocation4], 0
    // Predicated region
    $region2: #{critic_forward.1} parent=1 // pred_check
      _
    $region3: #{critic_forward.1} parent=1 // pred_check_branch
      %18 = sbr.rel (0) target = $region5
    $region4: #{critic_forward.1} parent=1 // pred_region
      _
    $region5: #{critic_forward.1} parent=1 // pred_fallthru
      _
    // Predicated region
    $region6: #{critic_forward.1} parent=1 // pred_check
      _
    $region7: #{critic_forward.1} parent=1 // pred_check_branch
      %20 = sbr.rel (0) target = $region9
    $region8: #{critic_forward.1} parent=1 // pred_region
      _
    $region9: #{critic_forward.1} parent=1 // pred_fallthru
      _
    // Predicated region
    $region10: #{critic_forward.1} parent=1 // pred_check
      _
    $region11: #{critic_forward.1} parent=1 // pred_check_branch
      %22 = sbr.rel (0) target = $region13
    $region12: #{critic_forward.1} parent=1 // pred_region
      _
    $region13: #{critic_forward.1} parent=1 // pred_fallthru
      _
    // Predicated region
    $region14: #{critic_forward.1} parent=1 // pred_check
      _
    $region15: #{critic_forward.1} parent=1 // pred_check_branch
      %24 = sbr.rel (0) target = $region17
    $region16: #{critic_forward.1} parent=1 // pred_region
      _
    $region17: #{critic_forward.1} parent=1 // pred_fallthru
      _
    // Predicated region
    $region18: #{critic_forward.1} parent=1 // pred_check
      _
    $region19: #{critic_forward.1} parent=1 // pred_check_branch
      %26 = sbr.rel (0) target = $region21
    $region20: #{critic_forward.1} parent=1 // pred_region
      _
    $region21: #{critic_forward.1} parent=1 // pred_fallthru
      _
    // Predicated region
    $region22: #{critic_forward.1} parent=1 // pred_check
      _
    $region23: #{critic_forward.1} parent=1 // pred_check_branch
      %28 = sbr.rel (0) target = $region25
    $region24: #{critic_forward.1} parent=1 // pred_region
      _
    $region25: #{critic_forward.1} parent=1 // pred_fallthru
      _
    // Predicated region
    $region26: #{critic_forward.1} parent=1 // pred_check
      _
    $region27: #{critic_forward.1} parent=1 // pred_check_branch
      %30 = sbr.rel (0) target = $region29
    $region28: #{critic_forward.1} parent=1 // pred_region
      _
    $region29: #{critic_forward.1} parent=1 // pred_fallthru
      _
    // Predicated region
    $region30: #{critic_forward.1} parent=1 // pred_check
      _
    $region31: #{critic_forward.1} parent=1 // pred_check_branch
      %32 = sbr.rel (0) target = $region33
    $region32: #{critic_forward.1} parent=1 // pred_region
      _
    $region33: #{critic_forward.1} parent=1 // pred_fallthru
      _
    // Predicated region
    $region34: #{critic_forward.1} parent=1 // pred_check
      _
    $region35: #{critic_forward.1} parent=1 // pred_check_branch
      %34 = sbr.rel (0) target = $region37
    $region36: #{critic_forward.1} parent=1 // pred_region
      _
    $region37: #{critic_forward.1} parent=1 // pred_fallthru
      _
    %v35 = vld [vmem:[%s0] sm:$0x7]
    %v36 = vld [vmem:[%s1] sm:$0x1]
    %v37 = vld [vmem:[%s2] sm:$0xff]
    %v38 = vld [vmem:[%s2 + $0x8] sm:$0xff]
    %v39 = vld [vmem:[%s2 + $0x10] sm:$0xff]
    %v40 = vld [vmem:[%s2 + $0x18] sm:$0xff]
    %v41 = vld [vmem:[%s3] sm:$0xff]
    %v42 = vld [vmem:[%s3 + $0x8] sm:$0xff]
    %v43 = vld [vmem:[%s3 + $0x10] sm:$0xff]
    %v44 = vld [vmem:[%s3 + $0x18] sm:$0xff]
    %v45 = vld [vmem:[%s4] sm:$0xff]
    %v46 = vld [vmem:[%s4 + $0x8] sm:$0xff]
    %v47 = vld [vmem:[%s4 + $0x10] sm:$0xff]
    %v48 = vld [vmem:[%s4 + $0x18] sm:$0xff]
    %50 = vset.pattern.permute.xlu0 0
    %51 = vperm.xlu0 %50, %v37
    %v52 = vpop.permute.xlu0 %51
    %55 = vset.pattern.permute.xlu0 0
    %56 = vperm.xlu0 %55, %v38
    %v57 = vpop.permute.xlu0 %56
    %60 = vset.pattern.permute.xlu0 0
    %61 = vperm.xlu0 %60, %v39
    %v62 = vpop.permute.xlu0 %61
    %65 = vset.pattern.permute.xlu0 0
    %66 = vperm.xlu0 %65, %v40
    %v67 = vpop.permute.xlu0 %66
    %v69 = vperm.slane %v35, 0
    %v70 = vmul.f32 %v52, %v69
    %v71 = vmul.f32 %v57, %v69
    %v72 = vmul.f32 %v62, %v69
    %v73 = vmul.f32 %v67, %v69
    %75 = vset.pattern.permute.xlu0 0
    %76 = vperm.xlu0 %75, %v45
    %v77 = vpop.permute.xlu0 %76
    %80 = vset.pattern.permute.xlu0 0
    %81 = vperm.xlu0 %80, %v46
    %v82 = vpop.permute.xlu0 %81
    %85 = vset.pattern.permute.xlu0 0
    %86 = vperm.xlu0 %85, %v47
    %v87 = vpop.permute.xlu0 %86
    %90 = vset.pattern.permute.xlu0 0
    %91 = vperm.xlu0 %90, %v48
    %v92 = vpop.permute.xlu0 %91
    %v94 = vadd.f32 %v77, %v70
    %v95 = vadd.f32 %v82, %v71
    %v96 = vadd.f32 %v87, %v72
    %v97 = vadd.f32 %v92, %v73
    %98 = vset.pattern.permute.xlu0 1
    %99 = vperm.xlu0 %98, %v37
    %v100 = vpop.permute.xlu0 %99
    %102 = vset.pattern.permute.xlu0 1
    %103 = vperm.xlu0 %102, %v38
    %v104 = vpop.permute.xlu0 %103
    %106 = vset.pattern.permute.xlu0 1
    %107 = vperm.xlu0 %106, %v39
    %v108 = vpop.permute.xlu0 %107
    %110 = vset.pattern.permute.xlu0 1
    %111 = vperm.xlu0 %110, %v40
    %v112 = vpop.permute.xlu0 %111
    %v114 = vperm.slane %v35, 1
    %v115 = vmul.f32 %v100, %v114
    %v116 = vmul.f32 %v104, %v114
    %v117 = vmul.f32 %v108, %v114
    %v118 = vmul.f32 %v112, %v114
    %v119 = vadd.f32 %v94, %v115
    %v120 = vadd.f32 %v95, %v116
    %v121 = vadd.f32 %v96, %v117
    %v122 = vadd.f32 %v97, %v118
    %123 = vset.pattern.permute.xlu0 2
    %124 = vperm.xlu0 %123, %v37
    %v125 = vpop.permute.xlu0 %124
    %127 = vset.pattern.permute.xlu0 2
    %128 = vperm.xlu0 %127, %v38
    %v129 = vpop.permute.xlu0 %128
    %131 = vset.pattern.permute.xlu0 2
    %132 = vperm.xlu0 %131, %v39
    %v133 = vpop.permute.xlu0 %132
    %135 = vset.pattern.permute.xlu0 2
    %136 = vperm.xlu0 %135, %v40
    %v137 = vpop.permute.xlu0 %136
    %v139 = vperm.slane %v35, 2
    %v140 = vmul.f32 %v125, %v139
    %v141 = vmul.f32 %v129, %v139
    %v142 = vmul.f32 %v133, %v139
    %v143 = vmul.f32 %v137, %v139
    %v144 = vadd.f32 %v119, %v140
    %v145 = vadd.f32 %v120, %v141
    %v146 = vadd.f32 %v121, %v142
    %v147 = vadd.f32 %v122, %v143
    %149 = vset.pattern.permute.xlu0 0
    %150 = vperm.xlu0 %149, %v41
    %v151 = vpop.permute.xlu0 %150
    %154 = vset.pattern.permute.xlu0 0
    %155 = vperm.xlu0 %154, %v42
    %v156 = vpop.permute.xlu0 %155
    %159 = vset.pattern.permute.xlu0 0
    %160 = vperm.xlu0 %159, %v43
    %v161 = vpop.permute.xlu0 %160
    %164 = vset.pattern.permute.xlu0 0
    %165 = vperm.xlu0 %164, %v44
    %v166 = vpop.permute.xlu0 %165
    %v169 = vperm.slane %v36, 0
    %v171 = vmul.f32 %v151, %v169
    %v172 = vmul.f32 %v156, %v169
    %v173 = vmul.f32 %v161, %v169
    %v174 = vmul.f32 %v166, %v169
    %v175 = vadd.f32 %v144, %v171
    %v176 = vadd.f32 %v145, %v172
    %v177 = vadd.f32 %v146, %v173
    %v178 = vadd.f32 %v147, %v174
    %v179 = vmax.f32 %v175, 0.0
    %v180 = vmax.f32 %v176, 0.0
    %v181 = vmax.f32 %v177, 0.0
    %v182 = vmax.f32 %v178, 0.0
    %v183 = vld [vmem:[%s5] sm:$0xff]
    %v184 = vld [vmem:[%s5 + $0x8] sm:$0xff]
    %v185 = vld [vmem:[%s5 + $0x10] sm:$0xff]
    %v186 = vld [vmem:[%s5 + $0x18] sm:$0xff]
    %v187 = vld [vmem:[%s6] sm:$0xff]
    %v188 = vld [vmem:[%s6 + $0x8] sm:$0xff]
    %v189 = vld [vmem:[%s6 + $0x10] sm:$0xff]
    %v190 = vld [vmem:[%s6 + $0x18] sm:$0xff]
    %192 = vset.pattern.permute.xlu0 0
    %193 = vperm.xlu0 %192, %v187
    %v194 = vpop.permute.xlu0 %193
    %197 = vset.pattern.permute.xlu0 0
    %198 = vperm.xlu0 %197, %v188
    %v199 = vpop.permute.xlu0 %198
    %202 = vset.pattern.permute.xlu0 0
    %203 = vperm.xlu0 %202, %v189
    %v204 = vpop.permute.xlu0 %203
    %207 = vset.pattern.permute.xlu0 0
    %208 = vperm.xlu0 %207, %v190
    %v209 = vpop.permute.xlu0 %208
    %vm211 = vcmask 261120
    %v213 = vsel %vm211, %v183, 0
    %v216 = vsel %vm211, %v184, 0
    %v219 = vsel %vm211, %v185, 0
    %v222 = vsel %vm211, %v186, 0
    %224 = vmatpush.msra.mxu0 0.0
    %225 = vmatpush.msra.mxu0 0.0
    %226 = vmatpush.msra.mxu0 0.0
    %227 = vmatpush.msra.mxu0 0.0
    %228 = vmatpush.msra.mxu0 0.0
    %229 = vmatpush.msra.mxu0 0.0
    %230 = vmatpush.msra.mxu0 0.0
    %231 = vmatpush.msra.mxu0 0.0
    %232 = vmatpush.msra.mxu0 0.0
    %233 = vmatpush.msra.mxu0 0.0
    %234 = vmatpush.msra.mxu0 0.0
    %235 = vmatpush.msra.mxu0 0.0
    %236 = vmatpush.msra.mxu0 %v182
    %237 = vmatpush.msra.mxu0 %v181
    %238 = vmatpush.msra.mxu0 %v180
    %239 = vmatpush.msra.mxu0 %v179
    %240 = vmatmul.f32.gmra.mxu0 %v213
    %v241 = vpop.f32.mrf.mxu0
    %v242 = vadd.f32 %v194, %v241
    %243 = vmatmul.f32.gmra.mxu0 %v216
    %v244 = vpop.f32.mrf.mxu0
    %v245 = vadd.f32 %v199, %v244
    %246 = vmatmul.f32.gmra.mxu0 %v219
    %v247 = vpop.f32.mrf.mxu0
    %v248 = vadd.f32 %v204, %v247
    %249 = vmatmul.f32.gmra.mxu0 %v222
    %v250 = vpop.f32.mrf.mxu0
    %v251 = vadd.f32 %v209, %v250
    %252 = vdwg.mxu0
    %v253 = vmax.f32 %v242, 0.0
    %v254 = vmax.f32 %v245, 0.0
    %v255 = vmax.f32 %v248, 0.0
    %v256 = vmax.f32 %v251, 0.0
    %v257 = vld [vmem:[%s7] sm:$0x1]
    %v258 = vld [vmem:[#allocation2] sm:$0x1]
    %260 = vset.pattern.permute.xlu0 0
    %261 = vperm.xlu0 %260, %v258
    %v262 = vpop.permute.xlu0 %261
    %v264 = vperm.slane %v262, 0
    %v266 = vsel %vm211, %v257, 0
    %268 = vmatpush.msra.mxu0 0.0
    %269 = vmatpush.msra.mxu0 0.0
    %270 = vmatpush.msra.mxu0 0.0
    %271 = vmatpush.msra.mxu0 0.0
    %272 = vmatpush.msra.mxu0 0.0
    %273 = vmatpush.msra.mxu0 0.0
    %274 = vmatpush.msra.mxu0 0.0
    %275 = vmatpush.msra.mxu0 0.0
    %276 = vmatpush.msra.mxu0 0.0
    %277 = vmatpush.msra.mxu0 0.0
    %278 = vmatpush.msra.mxu0 0.0
    %279 = vmatpush.msra.mxu0 0.0
    %280 = vmatpush.msra.mxu0 %v256
    %281 = vmatpush.msra.mxu0 %v255
    %282 = vmatpush.msra.mxu0 %v254
    %283 = vmatpush.msra.mxu0 %v253
    %284 = vmatmul.f32.gmra.mxu0 %v266
    %v285 = vpop.f32.mrf.mxu0
    %v286 = vadd.f32 %v264, %v285
    %287 = vdwg.mxu0
    %vm288 = vcmask 57344
    %289 = vst.msk [vmem:[#allocation3] sm:$0x1] %vm288, %v286
    // Predicated region
    $region38: #{critic_forward.1} parent=1 // pred_check
      _
    $region39: #{critic_forward.1} parent=1 // pred_check_branch
      %291 = sbr.rel (0) target = $region41
    $region40: #{critic_forward.1} parent=1 // pred_region
      %293 = vsyncadd [#allocation4], 0
      %s295 = sshll.u32 [#allocation3], 4
      %s296 = int_to_ptr.vmem [resolvable:$true] %s295
      %s297 = sshll.u32 %s9, 4
      %s298 = int_to_ptr.hbm [resolvable:$true] %s297
      %300 = dma.vmem_to_hbm [thread:$0]  %s296, 16, %s298, [#allocation4]
    $region41: #{critic_forward.1} parent=1 // pred_fallthru
      _
    // Predicated region
    $region42: #{critic_forward.1} parent=1 // pred_check
      _
    $region43: #{critic_forward.1} parent=1 // pred_check_branch
      %302 = sbr.rel (0) target = $region45
    $region44: #{critic_forward.1} parent=1 // pred_region
      %304 = dma.done [#allocation4], 16
    $region45: #{critic_forward.1} parent=1 // pred_fallthru
      _
    %305 = vsyncpa [#allocation4], 1

</llo_original>
